<compile_context>
chip_gen: v6e
topology: v6e:2x2x1
jax: 0.10.0
libtpu: 0.0.40
codegen_flags: <defaults>
</compile_context>

<pallas_src>
import jax
import jax.numpy as jnp
from jax.experimental import pallas as pl
from jax.experimental.pallas import tpu as pltpu

INPUT_DIM = 2
HIDDEN_DIM = 32
LATENT_DIM = 16

# Opt-in knob for bit-closeness of the recurrence matmul (None = default precision).
RECURRENCE_PRECISION = None  # e.g. jax.lax.Precision.HIGHEST


def _encoder_kernel(x_ref, w_ih_ref, w_hh_ref, b_ref, w_head_ref, b_head_ref,
                    out_ref):
    """Single-core kernel: full LSTM recurrence + fused output projection.

    x_ref      : (S*B, D)   time-major input, step t is rows [t*B, (t+1)*B)
    w_ih_ref   : (D, 4H)    input->gates weights, i/f/o columns pre-scaled by 0.5
    w_hh_ref   : (H, 4H)    hidden->gates weights, i/f/o columns pre-scaled by 0.5
    b_ref      : (1, 4H)    combined bias (b_ih + b_hh), i/f/o pre-scaled by 0.5
    w_head_ref : (H, 2L)    [w_mean | w_log_var] fused head weights
    b_head_ref : (1, 2L)    [b_mean | b_log_var] fused head bias
    out_ref    : (B, 2L)    [mean | log_var]

    Gate order is PyTorch's [i, f, g, o]; sigmoid(x) == 0.5*tanh(0.5*x) + 0.5, so the
    host-side 0.5 pre-scale lets one tanh over the whole gates vreg serve all gates.
    """
    H = HIDDEN_DIM
    B = out_ref.shape[0]
    S = x_ref.shape[0] // B

    # Loop-invariant constant lane vectors recovering sigmoid on i/f/o lanes and
    # passing tanh through on g lanes:   gates = tanh(pre) * rec_mul + rec_add.
    lane = jax.lax.broadcasted_iota(jnp.int32, (1, 4 * H), 1)
    is_g = (lane >= 2 * H) & (lane < 3 * H)
    rec_mul = jnp.where(is_g, 1.0, 0.5).astype(jnp.float32)
    rec_add = jnp.where(is_g, 0.0, 0.5).astype(jnp.float32)

    # --- Hoisted input projection: two exact-f32 VPU broadcast FMAs (no MXU). -----
    # (S*B, 1)*(1, 4H) + (S*B, 1)*(1, 4H) + (1, 4H) -> (S*B, 4H)
    x = x_ref[...]
    xg = (x[:, 0:1] * w_ih_ref[0:1, :]
          + x[:, 1:2] * w_ih_ref[1:2, :]
          + b_ref[...])

    w_hh = w_hh_ref[...]                       # load once, reused every step

    # --- Recurrence: state stays in vregs, loop fully unrolled (S is static). ----
    h = jnp.zeros((B, H), jnp.float32)
    c = jnp.zeros((B, H), jnp.float32)
    for t in range(S):
        pre = xg[t * B:(t + 1) * B, :] + jnp.dot(
            h, w_hh, preferred_element_type=jnp.float32,
            precision=RECURRENCE_PRECISION)    # (B, 4H) == one 128-lane vreg
        tg = jnp.tanh(pre)                     # single EUP push for all four gates
        gates = tg * rec_mul + rec_add         # one VPU FMA recovers sigmoid(i/f/o)
        i = gates[:, 0 * H:1 * H]
        f = gates[:, 1 * H:2 * H]
        g = gates[:, 2 * H:3 * H]
        o = gates[:, 3 * H:4 * H]
        c = f * c + i * g
        h = o * jnp.tanh(c)                    # second (and last) EUP push this step

    # --- Fused heads on the final CELL state: one matmul, one store. -------------
    out_ref[...] = (jnp.dot(c, w_head_ref[...],
                            preferred_element_type=jnp.float32)
                    + b_head_ref[...])


def pack_params(params):
    """One-time host-side packing: transposes, bias fuse, head concat and the 0.5
    gate pre-scale are hoisted out of the per-call path (they would otherwise emit
    ~5 tiny HLO ops around a microsecond-scale kernel every forward)."""
    H = HIDDEN_DIM
    gate_scale = jnp.concatenate([
        jnp.full((H,), 0.5, jnp.float32),   # i
        jnp.full((H,), 0.5, jnp.float32),   # f
        jnp.ones((H,), jnp.float32),        # g (stays tanh)
        jnp.full((H,), 0.5, jnp.float32),   # o
    ])
    w_ih = params["w_ih"].T * gate_scale                               # (D, 4H)
    w_hh = params["w_hh"].T * gate_scale                               # (H, 4H)
    b = ((params["b_ih"] + params["b_hh"]) * gate_scale).reshape(1, -1)  # (1, 4H)
    w_head = jnp.concatenate([params["w_mean"].T,
                              params["w_lv"].T], axis=1)               # (H, 2L)
    b_head = jnp.concatenate([params["b_mean"],
                              params["b_lv"]]).reshape(1, -1)          # (1, 2L)
    return {"w_ih": w_ih.astype(jnp.float32),
            "w_hh": w_hh.astype(jnp.float32),
            "b": b.astype(jnp.float32),
            "w_head": w_head.astype(jnp.float32),
            "b_head": b_head.astype(jnp.float32)}


def encoder_forward(x, packed):
    """x: (B, S, D) float32 (batch_first, like torch). Returns (mean, log_var)."""
    B, S, D = x.shape
    assert D == INPUT_DIM
    H, L = HIDDEN_DIM, LATENT_DIM

    # Time-major, flattened so each step's batch slab is contiguous rows.
    x_tm = jnp.transpose(x, (1, 0, 2)).reshape(S * B, D).astype(jnp.float32)

    # Advisory cost hint: serial recurrence, tiny byte traffic.
    flops = (S * (2 * B * H * 4 * H            # h @ W_hh
                  + B * 4 * H * (2 * D + 8))   # x-proj FMAs + gate elementwise
             + 2 * B * H * 2 * L)              # fused heads
    transcendentals = S * B * (4 * H + H)      # tanh(gates) + tanh(c) per step
    bytes_accessed = 4 * (x_tm.size
                          + packed["w_ih"].size + packed["w_hh"].size
                          + packed["b"].size + packed["w_head"].size
                          + packed["b_head"].size + B * 2 * L)
    cost = pl.CostEstimate(flops=flops,
                           transcendentals=transcendentals,
                           bytes_accessed=bytes_accessed)

    vmem = pl.BlockSpec(memory_space=pltpu.MemorySpace.VMEM)
    out = pl.pallas_call(
        _encoder_kernel,
        out_shape=jax.ShapeDtypeStruct((B, 2 * L), jnp.float32),
        in_specs=[vmem] * 6,
        out_specs=vmem,
        cost_estimate=cost,
    )(x_tm, packed["w_ih"], packed["w_hh"], packed["b"],
      packed["w_head"], packed["b_head"])

    mean = out[:, :L]
    log_var = out[:, L:]
    return mean, log_var


def encoder_reference(x, params):
    """Pure-JAX reference matching torch.nn.LSTM + two Linear heads."""
    B, S, D = x.shape
    H = HIDDEN_DIM
    b = params["b_ih"] + params["b_hh"]
    h = jnp.zeros((B, H), jnp.float32)
    c = jnp.zeros((B, H), jnp.float32)
    for t in range(S):
        gates = x[:, t] @ params["w_ih"].T + h @ params["w_hh"].T + b
        i, f, g, o = jnp.split(gates, 4, axis=-1)
        i, f, o = jax.nn.sigmoid(i), jax.nn.sigmoid(f), jax.nn.sigmoid(o)
        g = jnp.tanh(g)
        c = f * c + i * g
        h = o * jnp.tanh(c)
    mean = c @ params["w_mean"].T + params["b_mean"]
    logvar = c @ params["w_lv"].T + params["b_lv"]
    return mean, logvar


def init_params(key):
    """Deterministic synthetic parameters with the same shapes as the torch module."""
    ks = jax.random.split(key, 8)
    H, D, L = HIDDEN_DIM, INPUT_DIM, LATENT_DIM
    scale = 1.0 / jnp.sqrt(jnp.float32(H))
    u = lambda k, shape: jax.random.uniform(k, shape, jnp.float32, -scale, scale)
    return {
        "w_ih":   u(ks[0], (4 * H, D)),   # lstm.weight_ih_l0
        "w_hh":   u(ks[1], (4 * H, H)),   # lstm.weight_hh_l0
        "b_ih":   u(ks[2], (4 * H,)),     # lstm.bias_ih_l0
        "b_hh":   u(ks[3], (4 * H,)),     # lstm.bias_hh_l0
        "w_mean": u(ks[4], (L, H)),       # mean_fc.weight
        "b_mean": u(ks[5], (L,)),         # mean_fc.bias
        "w_lv":   u(ks[6], (L, H)),       # log_var_fc.weight
        "b_lv":   u(ks[7], (L,)),         # log_var_fc.bias
    }


if __name__ == "__main__":
    key = jax.random.PRNGKey(0)
    k_param, k_x = jax.random.split(key)
    params = init_params(k_param)
    packed = pack_params(params)          # one-time weight packing, outside per-call path

    B, S = 2, 8
    x = jax.random.normal(k_x, (B, S, INPUT_DIM), jnp.float32)

    fwd = jax.jit(encoder_forward)
    mean, log_var = fwd(x, packed)
    jax.block_until_ready((mean, log_var))

    ref_mean, ref_lv = encoder_reference(x, params)
    assert mean.shape == (B, LATENT_DIM) and log_var.shape == (B, LATENT_DIM)
    assert jnp.allclose(mean, ref_mean, atol=1e-4, rtol=1e-4)
    assert jnp.allclose(log_var, ref_lv, atol=1e-4, rtol=1e-4)

    print("KERNEL_OK")
</pallas_src>

<mosaic_0001>
module attributes {stable_mosaic.version = 11 : i64} {
  func.func @_encoder_kernel(%arg0: memref<16x2xf32, #tpu.memory_space<vmem>>, %arg1: memref<2x128xf32, #tpu.memory_space<vmem>>, %arg2: memref<32x128xf32, #tpu.memory_space<vmem>>, %arg3: memref<1x128xf32, #tpu.memory_space<vmem>>, %arg4: memref<32x32xf32, #tpu.memory_space<vmem>>, %arg5: memref<1x32xf32, #tpu.memory_space<vmem>>, %arg6: memref<2x32xf32, #tpu.memory_space<vmem>>) attributes {dimension_semantics = [], scalar_prefetch = 0 : i64, scratch_operands = 0 : i64, tpu.core_type = #tpu.core_type<tc>} {
    %0 = tpu.iota {dimensions = array<i32: 1>} : vector<1x128xi32>
    %c64_i32 = arith.constant 64 : i32
    %1 = vector.broadcast %c64_i32 : i32 to vector<1x128xi32>
    %2 = arith.cmpi sge, %0, %1 : vector<1x128xi32>
    %c96_i32 = arith.constant 96 : i32
    %3 = vector.broadcast %c96_i32 : i32 to vector<1x128xi32>
    %4 = arith.cmpi slt, %0, %3 : vector<1x128xi32>
    %5 = arith.andi %2, %4 : vector<1x128xi1>
    %cst = arith.constant 1.000000e+00 : f32
    %cst_0 = arith.constant 5.000000e-01 : f32
    %6 = vector.broadcast %cst : f32 to vector<1x128xf32>
    %7 = vector.broadcast %cst_0 : f32 to vector<1x128xf32>
    %8 = arith.select %5, %6, %7 : vector<1x128xi1>, vector<1x128xf32>
    %cst_1 = arith.constant 0.000000e+00 : f32
    %cst_2 = arith.constant 5.000000e-01 : f32
    %9 = vector.broadcast %cst_1 : f32 to vector<1x128xf32>
    %10 = vector.broadcast %cst_2 : f32 to vector<1x128xf32>
    %11 = arith.select %5, %9, %10 : vector<1x128xi1>, vector<1x128xf32>
    %c0 = arith.constant 0 : index
    %c0_3 = arith.constant 0 : index
    %12 = vector.load %arg0[%c0, %c0_3] : memref<16x2xf32, #tpu.memory_space<vmem>>, vector<16x2xf32>
    %13 = vector.extract_strided_slice %12 {offsets = [0, 0], sizes = [16, 1], strides = [1, 1]} : vector<16x2xf32> to vector<16x1xf32>
    %c0_4 = arith.constant 0 : index
    %c0_5 = arith.constant 0 : index
    %14 = vector.load %arg1[%c0_4, %c0_5] : memref<2x128xf32, #tpu.memory_space<vmem>>, vector<1x128xf32>
    %15 = vector.broadcast %13 : vector<16x1xf32> to vector<16x128xf32>
    %16 = vector.broadcast %14 : vector<1x128xf32> to vector<16x128xf32>
    %17 = arith.mulf %15, %16 : vector<16x128xf32>
    %18 = vector.extract_strided_slice %12 {offsets = [0, 1], sizes = [16, 1], strides = [1, 1]} : vector<16x2xf32> to vector<16x1xf32>
    %c1 = arith.constant 1 : index
    %c0_6 = arith.constant 0 : index
    %19 = vector.load %arg1[%c1, %c0_6] : memref<2x128xf32, #tpu.memory_space<vmem>>, vector<1x128xf32>
    %20 = vector.broadcast %18 : vector<16x1xf32> to vector<16x128xf32>
    %21 = vector.broadcast %19 : vector<1x128xf32> to vector<16x128xf32>
    %22 = arith.mulf %20, %21 : vector<16x128xf32>
    %23 = arith.addf %17, %22 : vector<16x128xf32>
    %c0_7 = arith.constant 0 : index
    %c0_8 = arith.constant 0 : index
    %24 = vector.load %arg3[%c0_7, %c0_8] : memref<1x128xf32, #tpu.memory_space<vmem>>, vector<1x128xf32>
    %25 = vector.broadcast %24 : vector<1x128xf32> to vector<16x128xf32>
    %26 = arith.addf %23, %25 : vector<16x128xf32>
    %c0_9 = arith.constant 0 : index
    %c0_10 = arith.constant 0 : index
    %27 = vector.load %arg2[%c0_9, %c0_10] : memref<32x128xf32, #tpu.memory_space<vmem>>, vector<32x128xf32>
    %cst_11 = arith.constant 0.000000e+00 : f32
    %28 = vector.broadcast %cst_11 : f32 to vector<2x32xf32>
    %cst_12 = arith.constant 0.000000e+00 : f32
    %29 = vector.broadcast %cst_12 : f32 to vector<2x32xf32>
    %30 = vector.extract_strided_slice %26 {offsets = [0, 0], sizes = [2, 128], strides = [1, 1]} : vector<16x128xf32> to vector<2x128xf32>
    %cst_13 = arith.constant dense<0.000000e+00> : vector<2x128xf32>
    %31 = tpu.matmul %28, %27, %cst_13 {dimension_numbers = #tpu.dot_dimension_numbers<[1], [0], [0], [1], [0, 0, 1, 1], [], []>} : vector<2x32xf32>, vector<32x128xf32>, vector<2x128xf32> -> vector<2x128xf32>
    %32 = arith.addf %30, %31 : vector<2x128xf32>
    %33 = math.tanh %32 : vector<2x128xf32>
    %34 = vector.broadcast %8 : vector<1x128xf32> to vector<2x128xf32>
    %35 = arith.mulf %33, %34 : vector<2x128xf32>
    %36 = vector.broadcast %11 : vector<1x128xf32> to vector<2x128xf32>
    %37 = arith.addf %35, %36 : vector<2x128xf32>
    %38 = vector.extract_strided_slice %37 {offsets = [0, 0], sizes = [2, 32], strides = [1, 1]} : vector<2x128xf32> to vector<2x32xf32>
    %39 = vector.extract_strided_slice %37 {offsets = [0, 32], sizes = [2, 32], strides = [1, 1]} : vector<2x128xf32> to vector<2x32xf32>
    %40 = vector.extract_strided_slice %37 {offsets = [0, 64], sizes = [2, 32], strides = [1, 1]} : vector<2x128xf32> to vector<2x32xf32>
    %41 = vector.extract_strided_slice %37 {offsets = [0, 96], sizes = [2, 32], strides = [1, 1]} : vector<2x128xf32> to vector<2x32xf32>
    %42 = arith.mulf %39, %29 : vector<2x32xf32>
    %43 = arith.mulf %38, %40 : vector<2x32xf32>
    %44 = arith.addf %42, %43 : vector<2x32xf32>
    %45 = math.tanh %44 : vector<2x32xf32>
    %46 = arith.mulf %41, %45 : vector<2x32xf32>
    %47 = vector.extract_strided_slice %26 {offsets = [2, 0], sizes = [2, 128], strides = [1, 1]} : vector<16x128xf32> to vector<2x128xf32>
    %cst_14 = arith.constant dense<0.000000e+00> : vector<2x128xf32>
    %48 = tpu.matmul %46, %27, %cst_14 {dimension_numbers = #tpu.dot_dimension_numbers<[1], [0], [0], [1], [0, 0, 1, 1], [], []>} : vector<2x32xf32>, vector<32x128xf32>, vector<2x128xf32> -> vector<2x128xf32>
    %49 = arith.addf %47, %48 : vector<2x128xf32>
    %50 = math.tanh %49 : vector<2x128xf32>
    %51 = vector.broadcast %8 : vector<1x128xf32> to vector<2x128xf32>
    %52 = arith.mulf %50, %51 : vector<2x128xf32>
    %53 = vector.broadcast %11 : vector<1x128xf32> to vector<2x128xf32>
    %54 = arith.addf %52, %53 : vector<2x128xf32>
    %55 = vector.extract_strided_slice %54 {offsets = [0, 0], sizes = [2, 32], strides = [1, 1]} : vector<2x128xf32> to vector<2x32xf32>
    %56 = vector.extract_strided_slice %54 {offsets = [0, 32], sizes = [2, 32], strides = [1, 1]} : vector<2x128xf32> to vector<2x32xf32>
    %57 = vector.extract_strided_slice %54 {offsets = [0, 64], sizes = [2, 32], strides = [1, 1]} : vector<2x128xf32> to vector<2x32xf32>
    %58 = vector.extract_strided_slice %54 {offsets = [0, 96], sizes = [2, 32], strides = [1, 1]} : vector<2x128xf32> to vector<2x32xf32>
    %59 = arith.mulf %56, %44 : vector<2x32xf32>
    %60 = arith.mulf %55, %57 : vector<2x32xf32>
    %61 = arith.addf %59, %60 : vector<2x32xf32>
    %62 = math.tanh %61 : vector<2x32xf32>
    %63 = arith.mulf %58, %62 : vector<2x32xf32>
    %64 = vector.extract_strided_slice %26 {offsets = [4, 0], sizes = [2, 128], strides = [1, 1]} : vector<16x128xf32> to vector<2x128xf32>
    %cst_15 = arith.constant dense<0.000000e+00> : vector<2x128xf32>
    %65 = tpu.matmul %63, %27, %cst_15 {dimension_numbers = #tpu.dot_dimension_numbers<[1], [0], [0], [1], [0, 0, 1, 1], [], []>} : vector<2x32xf32>, vector<32x128xf32>, vector<2x128xf32> -> vector<2x128xf32>
    %66 = arith.addf %64, %65 : vector<2x128xf32>
    %67 = math.tanh %66 : vector<2x128xf32>
    %68 = vector.broadcast %8 : vector<1x128xf32> to vector<2x128xf32>
    %69 = arith.mulf %67, %68 : vector<2x128xf32>
    %70 = vector.broadcast %11 : vector<1x128xf32> to vector<2x128xf32>
    %71 = arith.addf %69, %70 : vector<2x128xf32>
    %72 = vector.extract_strided_slice %71 {offsets = [0, 0], sizes = [2, 32], strides = [1, 1]} : vector<2x128xf32> to vector<2x32xf32>
    %73 = vector.extract_strided_slice %71 {offsets = [0, 32], sizes = [2, 32], strides = [1, 1]} : vector<2x128xf32> to vector<2x32xf32>
    %74 = vector.extract_strided_slice %71 {offsets = [0, 64], sizes = [2, 32], strides = [1, 1]} : vector<2x128xf32> to vector<2x32xf32>
    %75 = vector.extract_strided_slice %71 {offsets = [0, 96], sizes = [2, 32], strides = [1, 1]} : vector<2x128xf32> to vector<2x32xf32>
    %76 = arith.mulf %73, %61 : vector<2x32xf32>
    %77 = arith.mulf %72, %74 : vector<2x32xf32>
    %78 = arith.addf %76, %77 : vector<2x32xf32>
    %79 = math.tanh %78 : vector<2x32xf32>
    %80 = arith.mulf %75, %79 : vector<2x32xf32>
    %81 = vector.extract_strided_slice %26 {offsets = [6, 0], sizes = [2, 128], strides = [1, 1]} : vector<16x128xf32> to vector<2x128xf32>
    %cst_16 = arith.constant dense<0.000000e+00> : vector<2x128xf32>
    %82 = tpu.matmul %80, %27, %cst_16 {dimension_numbers = #tpu.dot_dimension_numbers<[1], [0], [0], [1], [0, 0, 1, 1], [], []>} : vector<2x32xf32>, vector<32x128xf32>, vector<2x128xf32> -> vector<2x128xf32>
    %83 = arith.addf %81, %82 : vector<2x128xf32>
    %84 = math.tanh %83 : vector<2x128xf32>
    %85 = vector.broadcast %8 : vector<1x128xf32> to vector<2x128xf32>
    %86 = arith.mulf %84, %85 : vector<2x128xf32>
    %87 = vector.broadcast %11 : vector<1x128xf32> to vector<2x128xf32>
    %88 = arith.addf %86, %87 : vector<2x128xf32>
    %89 = vector.extract_strided_slice %88 {offsets = [0, 0], sizes = [2, 32], strides = [1, 1]} : vector<2x128xf32> to vector<2x32xf32>
    %90 = vector.extract_strided_slice %88 {offsets = [0, 32], sizes = [2, 32], strides = [1, 1]} : vector<2x128xf32> to vector<2x32xf32>
    %91 = vector.extract_strided_slice %88 {offsets = [0, 64], sizes = [2, 32], strides = [1, 1]} : vector<2x128xf32> to vector<2x32xf32>
    %92 = vector.extract_strided_slice %88 {offsets = [0, 96], sizes = [2, 32], strides = [1, 1]} : vector<2x128xf32> to vector<2x32xf32>
    %93 = arith.mulf %90, %78 : vector<2x32xf32>
    %94 = arith.mulf %89, %91 : vector<2x32xf32>
    %95 = arith.addf %93, %94 : vector<2x32xf32>
    %96 = math.tanh %95 : vector<2x32xf32>
    %97 = arith.mulf %92, %96 : vector<2x32xf32>
    %98 = vector.extract_strided_slice %26 {offsets = [8, 0], sizes = [2, 128], strides = [1, 1]} : vector<16x128xf32> to vector<2x128xf32>
    %cst_17 = arith.constant dense<0.000000e+00> : vector<2x128xf32>
    %99 = tpu.matmul %97, %27, %cst_17 {dimension_numbers = #tpu.dot_dimension_numbers<[1], [0], [0], [1], [0, 0, 1, 1], [], []>} : vector<2x32xf32>, vector<32x128xf32>, vector<2x128xf32> -> vector<2x128xf32>
    %100 = arith.addf %98, %99 : vector<2x128xf32>
    %101 = math.tanh %100 : vector<2x128xf32>
    %102 = vector.broadcast %8 : vector<1x128xf32> to vector<2x128xf32>
    %103 = arith.mulf %101, %102 : vector<2x128xf32>
    %104 = vector.broadcast %11 : vector<1x128xf32> to vector<2x128xf32>
    %105 = arith.addf %103, %104 : vector<2x128xf32>
    %106 = vector.extract_strided_slice %105 {offsets = [0, 0], sizes = [2, 32], strides = [1, 1]} : vector<2x128xf32> to vector<2x32xf32>
    %107 = vector.extract_strided_slice %105 {offsets = [0, 32], sizes = [2, 32], strides = [1, 1]} : vector<2x128xf32> to vector<2x32xf32>
    %108 = vector.extract_strided_slice %105 {offsets = [0, 64], sizes = [2, 32], strides = [1, 1]} : vector<2x128xf32> to vector<2x32xf32>
    %109 = vector.extract_strided_slice %105 {offsets = [0, 96], sizes = [2, 32], strides = [1, 1]} : vector<2x128xf32> to vector<2x32xf32>
    %110 = arith.mulf %107, %95 : vector<2x32xf32>
    %111 = arith.mulf %106, %108 : vector<2x32xf32>
    %112 = arith.addf %110, %111 : vector<2x32xf32>
    %113 = math.tanh %112 : vector<2x32xf32>
    %114 = arith.mulf %109, %113 : vector<2x32xf32>
    %115 = vector.extract_strided_slice %26 {offsets = [10, 0], sizes = [2, 128], strides = [1, 1]} : vector<16x128xf32> to vector<2x128xf32>
    %cst_18 = arith.constant dense<0.000000e+00> : vector<2x128xf32>
    %116 = tpu.matmul %114, %27, %cst_18 {dimension_numbers = #tpu.dot_dimension_numbers<[1], [0], [0], [1], [0, 0, 1, 1], [], []>} : vector<2x32xf32>, vector<32x128xf32>, vector<2x128xf32> -> vector<2x128xf32>
    %117 = arith.addf %115, %116 : vector<2x128xf32>
    %118 = math.tanh %117 : vector<2x128xf32>
    %119 = vector.broadcast %8 : vector<1x128xf32> to vector<2x128xf32>
    %120 = arith.mulf %118, %119 : vector<2x128xf32>
    %121 = vector.broadcast %11 : vector<1x128xf32> to vector<2x128xf32>
    %122 = arith.addf %120, %121 : vector<2x128xf32>
    %123 = vector.extract_strided_slice %122 {offsets = [0, 0], sizes = [2, 32], strides = [1, 1]} : vector<2x128xf32> to vector<2x32xf32>
    %124 = vector.extract_strided_slice %122 {offsets = [0, 32], sizes = [2, 32], strides = [1, 1]} : vector<2x128xf32> to vector<2x32xf32>
    %125 = vector.extract_strided_slice %122 {offsets = [0, 64], sizes = [2, 32], strides = [1, 1]} : vector<2x128xf32> to vector<2x32xf32>
    %126 = vector.extract_strided_slice %122 {offsets = [0, 96], sizes = [2, 32], strides = [1, 1]} : vector<2x128xf32> to vector<2x32xf32>
    %127 = arith.mulf %124, %112 : vector<2x32xf32>
    %128 = arith.mulf %123, %125 : vector<2x32xf32>
    %129 = arith.addf %127, %128 : vector<2x32xf32>
    %130 = math.tanh %129 : vector<2x32xf32>
    %131 = arith.mulf %126, %130 : vector<2x32xf32>
    %132 = vector.extract_strided_slice %26 {offsets = [12, 0], sizes = [2, 128], strides = [1, 1]} : vector<16x128xf32> to vector<2x128xf32>
    %cst_19 = arith.constant dense<0.000000e+00> : vector<2x128xf32>
    %133 = tpu.matmul %131, %27, %cst_19 {dimension_numbers = #tpu.dot_dimension_numbers<[1], [0], [0], [1], [0, 0, 1, 1], [], []>} : vector<2x32xf32>, vector<32x128xf32>, vector<2x128xf32> -> vector<2x128xf32>
    %134 = arith.addf %132, %133 : vector<2x128xf32>
    %135 = math.tanh %134 : vector<2x128xf32>
    %136 = vector.broadcast %8 : vector<1x128xf32> to vector<2x128xf32>
    %137 = arith.mulf %135, %136 : vector<2x128xf32>
    %138 = vector.broadcast %11 : vector<1x128xf32> to vector<2x128xf32>
    %139 = arith.addf %137, %138 : vector<2x128xf32>
    %140 = vector.extract_strided_slice %139 {offsets = [0, 0], sizes = [2, 32], strides = [1, 1]} : vector<2x128xf32> to vector<2x32xf32>
    %141 = vector.extract_strided_slice %139 {offsets = [0, 32], sizes = [2, 32], strides = [1, 1]} : vector<2x128xf32> to vector<2x32xf32>
    %142 = vector.extract_strided_slice %139 {offsets = [0, 64], sizes = [2, 32], strides = [1, 1]} : vector<2x128xf32> to vector<2x32xf32>
    %143 = vector.extract_strided_slice %139 {offsets = [0, 96], sizes = [2, 32], strides = [1, 1]} : vector<2x128xf32> to vector<2x32xf32>
    %144 = arith.mulf %141, %129 : vector<2x32xf32>
    %145 = arith.mulf %140, %142 : vector<2x32xf32>
    %146 = arith.addf %144, %145 : vector<2x32xf32>
    %147 = math.tanh %146 : vector<2x32xf32>
    %148 = arith.mulf %143, %147 : vector<2x32xf32>
    %149 = vector.extract_strided_slice %26 {offsets = [14, 0], sizes = [2, 128], strides = [1, 1]} : vector<16x128xf32> to vector<2x128xf32>
    %cst_20 = arith.constant dense<0.000000e+00> : vector<2x128xf32>
    %150 = tpu.matmul %148, %27, %cst_20 {dimension_numbers = #tpu.dot_dimension_numbers<[1], [0], [0], [1], [0, 0, 1, 1], [], []>} : vector<2x32xf32>, vector<32x128xf32>, vector<2x128xf32> -> vector<2x128xf32>
    %151 = arith.addf %149, %150 : vector<2x128xf32>
    %152 = math.tanh %151 : vector<2x128xf32>
    %153 = vector.broadcast %8 : vector<1x128xf32> to vector<2x128xf32>
    %154 = arith.mulf %152, %153 : vector<2x128xf32>
    %155 = vector.broadcast %11 : vector<1x128xf32> to vector<2x128xf32>
    %156 = arith.addf %154, %155 : vector<2x128xf32>
    %157 = vector.extract_strided_slice %156 {offsets = [0, 0], sizes = [2, 32], strides = [1, 1]} : vector<2x128xf32> to vector<2x32xf32>
    %158 = vector.extract_strided_slice %156 {offsets = [0, 32], sizes = [2, 32], strides = [1, 1]} : vector<2x128xf32> to vector<2x32xf32>
    %159 = vector.extract_strided_slice %156 {offsets = [0, 64], sizes = [2, 32], strides = [1, 1]} : vector<2x128xf32> to vector<2x32xf32>
    %160 = arith.mulf %158, %146 : vector<2x32xf32>
    %161 = arith.mulf %157, %159 : vector<2x32xf32>
    %162 = arith.addf %160, %161 : vector<2x32xf32>
    %c0_21 = arith.constant 0 : index
    %c0_22 = arith.constant 0 : index
    %163 = vector.load %arg4[%c0_21, %c0_22] : memref<32x32xf32, #tpu.memory_space<vmem>>, vector<32x32xf32>
    %cst_23 = arith.constant dense<0.000000e+00> : vector<2x32xf32>
    %164 = tpu.matmul %162, %163, %cst_23 {dimension_numbers = #tpu.dot_dimension_numbers<[1], [0], [0], [1], [0, 0, 1, 1], [], []>} : vector<2x32xf32>, vector<32x32xf32>, vector<2x32xf32> -> vector<2x32xf32>
    %c0_24 = arith.constant 0 : index
    %c0_25 = arith.constant 0 : index
    %165 = vector.load %arg5[%c0_24, %c0_25] : memref<1x32xf32, #tpu.memory_space<vmem>>, vector<1x32xf32>
    %166 = vector.broadcast %165 : vector<1x32xf32> to vector<2x32xf32>
    %167 = arith.addf %164, %166 : vector<2x32xf32>
    %c0_26 = arith.constant 0 : index
    %c0_27 = arith.constant 0 : index
    %168 = vector.load %arg6[%c0_26, %c0_27] : memref<2x32xf32, #tpu.memory_space<vmem>>, vector<2x32xf32>
    tpu.vector_store %arg6[%c0_26, %c0_27], %167 {strides = array<i32>} : memref<2x32xf32, #tpu.memory_space<vmem>>, vector<2x32xf32>,
    return
  }
}

</mosaic_0001>

<llo_original>
// kernel: encoder_forward.1
$region0: #{encoder_forward.1}
  #allocation0 [shape = 'u32[]', space=smem, size = 0x4, offset = 0x4, fixed_abs, tag = 'smem constant byte address 0x4 - core index']
  #allocation1 [shape = 'u32[144,128]{1,0:T(1,128)}', space=vmem, size = 0x12000, scoped, tag = 'internal scratch']
  %s0 = inlined_call_operand.vmem [shape: f32[16,2], index: 0, kind: input, shape index: {}]
  %s1 = inlined_call_operand.vmem [shape: f32[2,128], index: 1, kind: input, shape index: {}]
  %s2 = inlined_call_operand.hbm [shape: f32[32,128], index: 2, kind: input, shape index: {}]
  %s3 = inlined_call_operand.vmem [shape: f32[1,128], index: 3, kind: input, shape index: {}]
  %s4 = inlined_call_operand.hbm [shape: f32[32,32], index: 4, kind: input, shape index: {}]
  %s5 = inlined_call_operand.vmem [shape: f32[1,32], index: 5, kind: input, shape index: {}]
  %s6 = inlined_call_operand.vmem [shape: f32[2,32], index: 6, kind: output, shape index: {}]
  %s7 = sld [smem:[#allocation0]]
  $region42: #{encoder_forward.1} parent=0
    _
  %s9 = ssub.s32 1, %s7
  %s10 = scalar_select 0, %s9, %s7
  $region1: #{encoder_forward.1} parent=0
    #allocation2 [shape = 'u8[16384]{0}', space=vmem, size = 0x4000, scoped, tag = 'input window, operand 2, single buffered']
    #allocation3 [shape = 's32[1]{0}', space=sflag, size = 0x4, scoped, tag = 'scoped memory for encoder_forward.1']
    #allocation4 [shape = 'u8[16384]{0}', space=vmem, size = 0x4000, scoped, tag = 'input window, operand 4, single buffered']
    #allocation5 [shape = 's32[1]{0}', space=sflag, size = 0x4, scoped, tag = 'scoped memory for encoder_forward.1']
    %11 = vsyncpa [#allocation3], 0
    %12 = vsyncpa [#allocation5], 0
    // Predicated region
    $region2: #{encoder_forward.1} parent=1 // pred_check
      _
    $region3: #{encoder_forward.1} parent=1 // pred_check_branch
      %14 = sbr.rel (0) target = $region5
    $region4: #{encoder_forward.1} parent=1 // pred_region
      _
    $region5: #{encoder_forward.1} parent=1 // pred_fallthru
      _
    // Predicated region
    $region6: #{encoder_forward.1} parent=1 // pred_check
      _
    $region7: #{encoder_forward.1} parent=1 // pred_check_branch
      %16 = sbr.rel (0) target = $region9
    $region8: #{encoder_forward.1} parent=1 // pred_region
      _
    $region9: #{encoder_forward.1} parent=1 // pred_fallthru
      _
    // Predicated region
    $region10: #{encoder_forward.1} parent=1 // pred_check
      _
    $region11: #{encoder_forward.1} parent=1 // pred_check_branch
      %18 = sbr.rel (0) target = $region13
    $region12: #{encoder_forward.1} parent=1 // pred_region
      %s20 = ssub.s32 512, 512
      %21 = vsyncadd [#allocation3], %s20
      %s22 = sshll.u32 [#allocation2], 4
      %s23 = int_to_ptr.vmem [resolvable:$true] %s22
      %28 = dma.hbm_to_vmem [thread:$0]  %s2, 512, %s23, [#allocation3], 128, 128, 8
    $region13: #{encoder_forward.1} parent=1 // pred_fallthru
      _
    // Predicated region
    $region14: #{encoder_forward.1} parent=1 // pred_check
      _
    $region15: #{encoder_forward.1} parent=1 // pred_check_branch
      %30 = sbr.rel (0) target = $region17
    $region16: #{encoder_forward.1} parent=1 // pred_region
      _
    $region17: #{encoder_forward.1} parent=1 // pred_fallthru
      _
    // Predicated region
    $region18: #{encoder_forward.1} parent=1 // pred_check
      _
    $region19: #{encoder_forward.1} parent=1 // pred_check_branch
      %32 = sbr.rel (0) target = $region21
    $region20: #{encoder_forward.1} parent=1 // pred_region
      %s34 = ssub.s32 512, 512
      %35 = vsyncadd [#allocation5], %s34
      %s36 = sshll.u32 [#allocation4], 4
      %s37 = int_to_ptr.vmem [resolvable:$true] %s36
      %42 = dma.hbm_to_vmem [thread:$0]  %s4, 512, %s37, [#allocation5], 128, 128, 8
    $region21: #{encoder_forward.1} parent=1 // pred_fallthru
      _
    // Predicated region
    $region22: #{encoder_forward.1} parent=1 // pred_check
      _
    $region23: #{encoder_forward.1} parent=1 // pred_check_branch
      %44 = sbr.rel (0) target = $region25
    $region24: #{encoder_forward.1} parent=1 // pred_region
      _
    $region25: #{encoder_forward.1} parent=1 // pred_fallthru
      _
    // Predicated region
    $region26: #{encoder_forward.1} parent=1 // pred_check
      _
    $region27: #{encoder_forward.1} parent=1 // pred_check_branch
      %46 = sbr.rel (0) target = $region29
    $region28: #{encoder_forward.1} parent=1 // pred_region
      %47 = dma.done [#allocation3], 512
    $region29: #{encoder_forward.1} parent=1 // pred_fallthru
      _
    // Predicated region
    $region30: #{encoder_forward.1} parent=1 // pred_check
      _
    $region31: #{encoder_forward.1} parent=1 // pred_check_branch
      %49 = sbr.rel (0) target = $region33
    $region32: #{encoder_forward.1} parent=1 // pred_region
      %50 = dma.done [#allocation5], 512
    $region33: #{encoder_forward.1} parent=1 // pred_fallthru
      _
    %v51 = vlaneseq
    %v52 = vand.u32 %v51, 127
    %vm53 = vcmp.ge.s32.totalorder %v52, 64
    %vm54 = vcmp.lt.s32.totalorder %v52, 96
    %vm55 = vmand %vm53, %vm54
    %v56 = vsel %vm55, 1.0, 0.5
    %v57 = vsel %vm55, 0.0, 0.5
    %v58 = vld [vmem:[%s0] sm:$0xff]
    %v59 = vld [vmem:[%s0 + $0x8] sm:$0xff]
    %v60 = vld [vmem:[%s1] sm:$0x1]
    %62 = vset.pattern.permute.xlu0 0
    %63 = vperm.xlu0 %62, %v58
    %v64 = vpop.permute.xlu0 %63
    %67 = vset.pattern.permute.xlu0 0
    %68 = vperm.xlu0 %67, %v59
    %v69 = vpop.permute.xlu0 %68
    %v71 = vlaneseq
    %v72 = vshrl.u32 %v71, 7
    %v73 = vsub.s32 0, %v72
    %v74 = vrot.slane %v60, %v73
    %v75 = vmul.f32 %v64, %v74
    %v76 = vmul.f32 %v69, %v74
    %v77 = vld [vmem:[%s1 + $0x1] sm:$0x1]
    %78 = vset.pattern.permute.xlu0 1
    %79 = vperm.xlu0 %78, %v58
    %v80 = vpop.permute.xlu0 %79
    %82 = vset.pattern.permute.xlu0 1
    %83 = vperm.xlu0 %82, %v59
    %v84 = vpop.permute.xlu0 %83
    %v86 = vlaneseq
    %v87 = vshrl.u32 %v86, 7
    %v88 = vsub.s32 0, %v87
    %v89 = vrot.slane %v77, %v88
    %v90 = vmul.f32 %v80, %v89
    %v91 = vmul.f32 %v84, %v89
    %v92 = vadd.f32 %v75, %v90
    %v93 = vadd.f32 %v76, %v91
    %v94 = vld [vmem:[%s3] sm:$0x1]
    %v96 = vlaneseq
    %v97 = vshrl.u32 %v96, 7
    %v98 = vsub.s32 0, %v97
    %v99 = vrot.slane %v94, %v98
    %v101 = vadd.f32 %v92, %v99
    %v102 = vadd.f32 %v93, %v99
    %v103 = vld [vmem:[#allocation2] sm:$0xff]
    %v104 = vld [vmem:[#allocation2 + $0x8] sm:$0xff]
    %v105 = vld [vmem:[#allocation2 + $0x10] sm:$0xff]
    %v106 = vld [vmem:[#allocation2 + $0x18] sm:$0xff]
    %vm107 = vcmask 261120
    %v109 = vsel %vm107, 0.0, 0
    %111 = vmatprep.subr.mxu0 0.0
    %112 = vmatpush1.msra.mxu0 0.0
    %113 = vmatprep.subr.mxu0 0.0
    %114 = vmatpush1.msra.mxu0 0.0
    %115 = vmatprep.subr.mxu0 0.0
    %116 = vmatpush1.msra.mxu0 0.0
    %117 = vmatprep.subr.mxu0 0.0
    %118 = vmatpush1.msra.mxu0 0.0
    %119 = vmatprep.subr.mxu0 0.0
    %120 = vmatpush1.msra.mxu0 0.0
    %121 = vmatprep.subr.mxu0 0.0
    %122 = vmatpush1.msra.mxu0 0.0
    %123 = vmatprep.subr.mxu0 0.0
    %124 = vmatpush1.msra.mxu0 0.0
    %125 = vmatprep.subr.mxu0 0.0
    %126 = vmatpush1.msra.mxu0 0.0
    %127 = vmatprep.subr.mxu0 0.0
    %128 = vmatpush1.msra.mxu0 0.0
    %129 = vmatprep.subr.mxu0 0.0
    %130 = vmatpush1.msra.mxu0 0.0
    %131 = vmatprep.subr.mxu0 0.0
    %132 = vmatpush1.msra.mxu0 0.0
    %133 = vmatprep.subr.mxu0 0.0
    %134 = vmatpush1.msra.mxu0 0.0
    %135 = vmatprep.subr.mxu0 0.0
    %136 = vmatpush1.msra.mxu0 %v106
    %137 = vmatprep.subr.mxu0 0.0
    %138 = vmatpush1.msra.mxu0 %v105
    %139 = vmatprep.subr.mxu0 0.0
    %140 = vmatpush1.msra.mxu0 %v104
    %141 = vmatprep.subr.mxu0 0.0
    %142 = vmatpush1.msra.mxu0 %v103
    %143 = vmatprep.subr.mxu0 0.0
    %144 = vmatpush2.msra.mxu0 0.0
    %145 = vmatprep.subr.mxu0 0.0
    %146 = vmatpush2.msra.mxu0 0.0
    %147 = vmatprep.subr.mxu0 0.0
    %148 = vmatpush2.msra.mxu0 0.0
    %149 = vmatprep.subr.mxu0 0.0
    %150 = vmatpush2.msra.mxu0 0.0
    %151 = vmatprep.subr.mxu0 0.0
    %152 = vmatpush2.msra.mxu0 0.0
    %153 = vmatprep.subr.mxu0 0.0
    %154 = vmatpush2.msra.mxu0 0.0
    %155 = vmatprep.subr.mxu0 0.0
    %156 = vmatpush2.msra.mxu0 0.0
    %157 = vmatprep.subr.mxu0 0.0
    %158 = vmatpush2.msra.mxu0 0.0
    %159 = vmatprep.subr.mxu0 0.0
    %160 = vmatpush2.msra.mxu0 0.0
    %161 = vmatprep.subr.mxu0 0.0
    %162 = vmatpush2.msra.mxu0 0.0
    %163 = vmatprep.subr.mxu0 0.0
    %164 = vmatpush2.msra.mxu0 0.0
    %165 = vmatprep.subr.mxu0 0.0
    %166 = vmatpush2.msra.mxu0 0.0
    %167 = vmatprep.subr.mxu0 0.0
    %168 = vmatpush2.msra.mxu0 0.0
    %169 = vmatprep.subr.mxu0 0.0
    %170 = vmatpush2.msra.mxu0 0.0
    %171 = vmatprep.subr.mxu0 0.0
    %172 = vmatpush2.msra.mxu0 0.0
    %173 = vmatprep.subr.mxu0 0.0
    %174 = vmatpush2.msra.mxu0 0.0
    %175 = vmatprep.mubr.f32.mxu0 0.0
    %176 = vmatmul.mubr.f32.gmra.mxu0 %v109
    %v177 = vpop.f32.mrf.mxu0
    %v178 = vadd.f32 0.0, %v177
    %v179 = vpop.f32.mrf.mxu0
    %180 = vdwg.mxu0
    %v181 = vadd.f32 %v101, %v178
    %v182 = vtanh.pop %v181
    %v183 = vmul.f32 %v182, %v56
    %v184 = vadd.f32 %v183, %v57
    %v185 = vmul.f32 %v184, 0.0
    %187 = vrot.lane.b32.xlu0 %v184, 64
    %v188 = vpop.permute.xlu0 %187
    %v190 = vmul.f32 %v184, %v188
    %192 = vrot.lane.b32.xlu0 %v190, 32
    %v193 = vpop.permute.xlu0 %192
    %v195 = vadd.f32 %v185, %v193
    %v196 = vtanh.pop %v195
    %198 = vrot.lane.b32.xlu0 %v196, 64
    %v199 = vpop.permute.xlu0 %198
    %v201 = vmul.f32 %v184, %v199
    %203 = vrot.lane.b32.xlu0 %v201, 32
    %v204 = vpop.permute.xlu0 %203
    %v205 = vsel %vm107, %v204, 0
    %207 = vmatprep.subr.mxu0 0.0
    %208 = vmatpush1.msra.mxu0 0.0
    %209 = vmatprep.subr.mxu0 0.0
    %210 = vmatpush1.msra.mxu0 0.0
    %211 = vmatprep.subr.mxu0 0.0
    %212 = vmatpush1.msra.mxu0 0.0
    %213 = vmatprep.subr.mxu0 0.0
    %214 = vmatpush1.msra.mxu0 0.0
    %215 = vmatprep.subr.mxu0 0.0
    %216 = vmatpush1.msra.mxu0 0.0
    %217 = vmatprep.subr.mxu0 0.0
    %218 = vmatpush1.msra.mxu0 0.0
    %219 = vmatprep.subr.mxu0 0.0
    %220 = vmatpush1.msra.mxu0 0.0
    %221 = vmatprep.subr.mxu0 0.0
    %222 = vmatpush1.msra.mxu0 0.0
    %223 = vmatprep.subr.mxu0 0.0
    %224 = vmatpush1.msra.mxu0 0.0
    %225 = vmatprep.subr.mxu0 0.0
    %226 = vmatpush1.msra.mxu0 0.0
    %227 = vmatprep.subr.mxu0 0.0
    %228 = vmatpush1.msra.mxu0 0.0
    %229 = vmatprep.subr.mxu0 0.0
    %230 = vmatpush1.msra.mxu0 0.0
    %231 = vmatprep.subr.mxu0 0.0
    %232 = vmatpush1.msra.mxu0 %v106
    %233 = vmatprep.subr.mxu0 0.0
    %234 = vmatpush1.msra.mxu0 %v105
    %235 = vmatprep.subr.mxu0 0.0
    %236 = vmatpush1.msra.mxu0 %v104
    %237 = vmatprep.subr.mxu0 0.0
    %238 = vmatpush1.msra.mxu0 %v103
    %239 = vmatprep.subr.mxu0 0.0
    %240 = vmatpush2.msra.mxu0 0.0
    %241 = vmatprep.subr.mxu0 0.0
    %242 = vmatpush2.msra.mxu0 0.0
    %243 = vmatprep.subr.mxu0 0.0
    %244 = vmatpush2.msra.mxu0 0.0
    %245 = vmatprep.subr.mxu0 0.0
    %246 = vmatpush2.msra.mxu0 0.0
    %247 = vmatprep.subr.mxu0 0.0
    %248 = vmatpush2.msra.mxu0 0.0
    %249 = vmatprep.subr.mxu0 0.0
    %250 = vmatpush2.msra.mxu0 0.0
    %251 = vmatprep.subr.mxu0 0.0
    %252 = vmatpush2.msra.mxu0 0.0
    %253 = vmatprep.subr.mxu0 0.0
    %254 = vmatpush2.msra.mxu0 0.0
    %255 = vmatprep.subr.mxu0 0.0
    %256 = vmatpush2.msra.mxu0 0.0
    %257 = vmatprep.subr.mxu0 0.0
    %258 = vmatpush2.msra.mxu0 0.0
    %259 = vmatprep.subr.mxu0 0.0
    %260 = vmatpush2.msra.mxu0 0.0
    %261 = vmatprep.subr.mxu0 0.0
    %262 = vmatpush2.msra.mxu0 0.0
    %263 = vmatprep.subr.mxu0 0.0
    %264 = vmatpush2.msra.mxu0 0.0
    %265 = vmatprep.subr.mxu0 0.0
    %266 = vmatpush2.msra.mxu0 0.0
    %267 = vmatprep.subr.mxu0 0.0
    %268 = vmatpush2.msra.mxu0 0.0
    %269 = vmatprep.subr.mxu0 0.0
    %270 = vmatpush2.msra.mxu0 0.0
    %271 = vmatprep.mubr.f32.mxu0 0.0
    %272 = vmatmul.mubr.f32.gmra.mxu0 %v205
    %v273 = vpop.f32.mrf.mxu0
    %v274 = vadd.f32 0.0, %v273
    %v275 = vpop.f32.mrf.mxu0
    %276 = vdwg.mxu0
    %v278 = vrot.slane %v274, 6
    %v280 = vadd.f32 %v101, %v278
    %v281 = vtanh.pop %v280
    %v282 = vmul.f32 %v281, %v56
    %v283 = vadd.f32 %v282, %v57
    %v285 = vrot.slane %v195, 6
    %v287 = vmul.f32 %v283, %v285
    %289 = vrot.lane.b32.xlu0 %v283, 64
    %v290 = vpop.permute.xlu0 %289
    %v292 = vmul.f32 %v283, %v290
    %294 = vrot.lane.b32.xlu0 %v292, 32
    %v295 = vpop.permute.xlu0 %294
    %v297 = vadd.f32 %v287, %v295
    %v298 = vtanh.pop %v297
    %300 = vrot.lane.b32.xlu0 %v298, 64
    %v301 = vpop.permute.xlu0 %300
    %v303 = vmul.f32 %v283, %v301
    %v305 = vrot.slane %v303, 2
    %306 = vrot.lane.b32.xlu0 %v305, 32
    %v307 = vpop.permute.xlu0 %306
    %v308 = vsel %vm107, %v307, 0
    %310 = vmatprep.subr.mxu0 0.0
    %311 = vmatpush1.msra.mxu0 0.0
    %312 = vmatprep.subr.mxu0 0.0
    %313 = vmatpush1.msra.mxu0 0.0
    %314 = vmatprep.subr.mxu0 0.0
    %315 = vmatpush1.msra.mxu0 0.0
    %316 = vmatprep.subr.mxu0 0.0
    %317 = vmatpush1.msra.mxu0 0.0
    %318 = vmatprep.subr.mxu0 0.0
    %319 = vmatpush1.msra.mxu0 0.0
    %320 = vmatprep.subr.mxu0 0.0
    %321 = vmatpush1.msra.mxu0 0.0
    %322 = vmatprep.subr.mxu0 0.0
    %323 = vmatpush1.msra.mxu0 0.0
    %324 = vmatprep.subr.mxu0 0.0
    %325 = vmatpush1.msra.mxu0 0.0
    %326 = vmatprep.subr.mxu0 0.0
    %327 = vmatpush1.msra.mxu0 0.0
    %328 = vmatprep.subr.mxu0 0.0
    %329 = vmatpush1.msra.mxu0 0.0
    %330 = vmatprep.subr.mxu0 0.0
    %331 = vmatpush1.msra.mxu0 0.0
    %332 = vmatprep.subr.mxu0 0.0
    %333 = vmatpush1.msra.mxu0 0.0
    %334 = vmatprep.subr.mxu0 0.0
    %335 = vmatpush1.msra.mxu0 %v106
    %336 = vmatprep.subr.mxu0 0.0
    %337 = vmatpush1.msra.mxu0 %v105
    %338 = vmatprep.subr.mxu0 0.0
    %339 = vmatpush1.msra.mxu0 %v104
    %340 = vmatprep.subr.mxu0 0.0
    %341 = vmatpush1.msra.mxu0 %v103
    %342 = vmatprep.subr.mxu0 0.0
    %343 = vmatpush2.msra.mxu0 0.0
    %344 = vmatprep.subr.mxu0 0.0
    %345 = vmatpush2.msra.mxu0 0.0
    %346 = vmatprep.subr.mxu0 0.0
    %347 = vmatpush2.msra.mxu0 0.0
    %348 = vmatprep.subr.mxu0 0.0
    %349 = vmatpush2.msra.mxu0 0.0
    %350 = vmatprep.subr.mxu0 0.0
    %351 = vmatpush2.msra.mxu0 0.0
    %352 = vmatprep.subr.mxu0 0.0
    %353 = vmatpush2.msra.mxu0 0.0
    %354 = vmatprep.subr.mxu0 0.0
    %355 = vmatpush2.msra.mxu0 0.0
    %356 = vmatprep.subr.mxu0 0.0
    %357 = vmatpush2.msra.mxu0 0.0
    %358 = vmatprep.subr.mxu0 0.0
    %359 = vmatpush2.msra.mxu0 0.0
    %360 = vmatprep.subr.mxu0 0.0
    %361 = vmatpush2.msra.mxu0 0.0
    %362 = vmatprep.subr.mxu0 0.0
    %363 = vmatpush2.msra.mxu0 0.0
    %364 = vmatprep.subr.mxu0 0.0
    %365 = vmatpush2.msra.mxu0 0.0
    %366 = vmatprep.subr.mxu0 0.0
    %367 = vmatpush2.msra.mxu0 0.0
    %368 = vmatprep.subr.mxu0 0.0
    %369 = vmatpush2.msra.mxu0 0.0
    %370 = vmatprep.subr.mxu0 0.0
    %371 = vmatpush2.msra.mxu0 0.0
    %372 = vmatprep.subr.mxu0 0.0
    %373 = vmatpush2.msra.mxu0 0.0
    %374 = vmatprep.mubr.f32.mxu0 0.0
    %375 = vmatmul.mubr.f32.gmra.mxu0 %v308
    %v376 = vpop.f32.mrf.mxu0
    %v377 = vadd.f32 0.0, %v376
    %v378 = vpop.f32.mrf.mxu0
    %379 = vdwg.mxu0
    %v381 = vrot.slane %v377, 4
    %v383 = vadd.f32 %v101, %v381
    %v384 = vtanh.pop %v383
    %v385 = vmul.f32 %v384, %v56
    %v386 = vadd.f32 %v385, %v57
    %v388 = vrot.slane %v297, 6
    %v390 = vmul.f32 %v386, %v388
    %392 = vrot.lane.b32.xlu0 %v386, 64
    %v393 = vpop.permute.xlu0 %392
    %v395 = vmul.f32 %v386, %v393
    %397 = vrot.lane.b32.xlu0 %v395, 32
    %v398 = vpop.permute.xlu0 %397
    %v400 = vadd.f32 %v390, %v398
    %v401 = vtanh.pop %v400
    %403 = vrot.lane.b32.xlu0 %v401, 64
    %v404 = vpop.permute.xlu0 %403
    %v406 = vmul.f32 %v386, %v404
    %v408 = vrot.slane %v406, 4
    %409 = vrot.lane.b32.xlu0 %v408, 32
    %v410 = vpop.permute.xlu0 %409
    %v411 = vsel %vm107, %v410, 0
    %413 = vmatprep.subr.mxu0 0.0
    %414 = vmatpush1.msra.mxu0 0.0
    %415 = vmatprep.subr.mxu0 0.0
    %416 = vmatpush1.msra.mxu0 0.0
    %417 = vmatprep.subr.mxu0 0.0
    %418 = vmatpush1.msra.mxu0 0.0
    %419 = vmatprep.subr.mxu0 0.0
    %420 = vmatpush1.msra.mxu0 0.0
    %421 = vmatprep.subr.mxu0 0.0
    %422 = vmatpush1.msra.mxu0 0.0
    %423 = vmatprep.subr.mxu0 0.0
    %424 = vmatpush1.msra.mxu0 0.0
    %425 = vmatprep.subr.mxu0 0.0
    %426 = vmatpush1.msra.mxu0 0.0
    %427 = vmatprep.subr.mxu0 0.0
    %428 = vmatpush1.msra.mxu0 0.0
    %429 = vmatprep.subr.mxu0 0.0
    %430 = vmatpush1.msra.mxu0 0.0
    %431 = vmatprep.subr.mxu0 0.0
    %432 = vmatpush1.msra.mxu0 0.0
    %433 = vmatprep.subr.mxu0 0.0
    %434 = vmatpush1.msra.mxu0 0.0
    %435 = vmatprep.subr.mxu0 0.0
    %436 = vmatpush1.msra.mxu0 0.0
    %437 = vmatprep.subr.mxu0 0.0
    %438 = vmatpush1.msra.mxu0 %v106
    %439 = vmatprep.subr.mxu0 0.0
    %440 = vmatpush1.msra.mxu0 %v105
    %441 = vmatprep.subr.mxu0 0.0
    %442 = vmatpush1.msra.mxu0 %v104
    %443 = vmatprep.subr.mxu0 0.0
    %444 = vmatpush1.msra.mxu0 %v103
    %445 = vmatprep.subr.mxu0 0.0
    %446 = vmatpush2.msra.mxu0 0.0
    %447 = vmatprep.subr.mxu0 0.0
    %448 = vmatpush2.msra.mxu0 0.0
    %449 = vmatprep.subr.mxu0 0.0
    %450 = vmatpush2.msra.mxu0 0.0
    %451 = vmatprep.subr.mxu0 0.0
    %452 = vmatpush2.msra.mxu0 0.0
    %453 = vmatprep.subr.mxu0 0.0
    %454 = vmatpush2.msra.mxu0 0.0
    %455 = vmatprep.subr.mxu0 0.0
    %456 = vmatpush2.msra.mxu0 0.0
    %457 = vmatprep.subr.mxu0 0.0
    %458 = vmatpush2.msra.mxu0 0.0
    %459 = vmatprep.subr.mxu0 0.0
    %460 = vmatpush2.msra.mxu0 0.0
    %461 = vmatprep.subr.mxu0 0.0
    %462 = vmatpush2.msra.mxu0 0.0
    %463 = vmatprep.subr.mxu0 0.0
    %464 = vmatpush2.msra.mxu0 0.0
    %465 = vmatprep.subr.mxu0 0.0
    %466 = vmatpush2.msra.mxu0 0.0
    %467 = vmatprep.subr.mxu0 0.0
    %468 = vmatpush2.msra.mxu0 0.0
    %469 = vmatprep.subr.mxu0 0.0
    %470 = vmatpush2.msra.mxu0 0.0
    %471 = vmatprep.subr.mxu0 0.0
    %472 = vmatpush2.msra.mxu0 0.0
    %473 = vmatprep.subr.mxu0 0.0
    %474 = vmatpush2.msra.mxu0 0.0
    %475 = vmatprep.subr.mxu0 0.0
    %476 = vmatpush2.msra.mxu0 0.0
    %477 = vmatprep.mubr.f32.mxu0 0.0
    %478 = vmatmul.mubr.f32.gmra.mxu0 %v411
    %v479 = vpop.f32.mrf.mxu0
    %v480 = vadd.f32 0.0, %v479
    %v481 = vpop.f32.mrf.mxu0
    %482 = vdwg.mxu0
    %v484 = vrot.slane %v480, 2
    %v486 = vadd.f32 %v101, %v484
    %v487 = vtanh.pop %v486
    %v488 = vmul.f32 %v487, %v56
    %v489 = vadd.f32 %v488, %v57
    %v491 = vrot.slane %v400, 6
    %v493 = vmul.f32 %v489, %v491
    %495 = vrot.lane.b32.xlu0 %v489, 64
    %v496 = vpop.permute.xlu0 %495
    %v498 = vmul.f32 %v489, %v496
    %500 = vrot.lane.b32.xlu0 %v498, 32
    %v501 = vpop.permute.xlu0 %500
    %v503 = vadd.f32 %v493, %v501
    %v504 = vtanh.pop %v503
    %506 = vrot.lane.b32.xlu0 %v504, 64
    %v507 = vpop.permute.xlu0 %506
    %v509 = vmul.f32 %v489, %v507
    %v511 = vrot.slane %v509, 6
    %512 = vrot.lane.b32.xlu0 %v511, 32
    %v513 = vpop.permute.xlu0 %512
    %v514 = vsel %vm107, %v513, 0
    %516 = vmatprep.subr.mxu0 0.0
    %517 = vmatpush1.msra.mxu0 0.0
    %518 = vmatprep.subr.mxu0 0.0
    %519 = vmatpush1.msra.mxu0 0.0
    %520 = vmatprep.subr.mxu0 0.0
    %521 = vmatpush1.msra.mxu0 0.0
    %522 = vmatprep.subr.mxu0 0.0
    %523 = vmatpush1.msra.mxu0 0.0
    %524 = vmatprep.subr.mxu0 0.0
    %525 = vmatpush1.msra.mxu0 0.0
    %526 = vmatprep.subr.mxu0 0.0
    %527 = vmatpush1.msra.mxu0 0.0
    %528 = vmatprep.subr.mxu0 0.0
    %529 = vmatpush1.msra.mxu0 0.0
    %530 = vmatprep.subr.mxu0 0.0
    %531 = vmatpush1.msra.mxu0 0.0
    %532 = vmatprep.subr.mxu0 0.0
    %533 = vmatpush1.msra.mxu0 0.0
    %534 = vmatprep.subr.mxu0 0.0
    %535 = vmatpush1.msra.mxu0 0.0
    %536 = vmatprep.subr.mxu0 0.0
    %537 = vmatpush1.msra.mxu0 0.0
    %538 = vmatprep.subr.mxu0 0.0
    %539 = vmatpush1.msra.mxu0 0.0
    %540 = vmatprep.subr.mxu0 0.0
    %541 = vmatpush1.msra.mxu0 %v106
    %542 = vmatprep.subr.mxu0 0.0
    %543 = vmatpush1.msra.mxu0 %v105
    %544 = vmatprep.subr.mxu0 0.0
    %545 = vmatpush1.msra.mxu0 %v104
    %546 = vmatprep.subr.mxu0 0.0
    %547 = vmatpush1.msra.mxu0 %v103
    %548 = vmatprep.subr.mxu0 0.0
    %549 = vmatpush2.msra.mxu0 0.0
    %550 = vmatprep.subr.mxu0 0.0
    %551 = vmatpush2.msra.mxu0 0.0
    %552 = vmatprep.subr.mxu0 0.0
    %553 = vmatpush2.msra.mxu0 0.0
    %554 = vmatprep.subr.mxu0 0.0
    %555 = vmatpush2.msra.mxu0 0.0
    %556 = vmatprep.subr.mxu0 0.0
    %557 = vmatpush2.msra.mxu0 0.0
    %558 = vmatprep.subr.mxu0 0.0
    %559 = vmatpush2.msra.mxu0 0.0
    %560 = vmatprep.subr.mxu0 0.0
    %561 = vmatpush2.msra.mxu0 0.0
    %562 = vmatprep.subr.mxu0 0.0
    %563 = vmatpush2.msra.mxu0 0.0
    %564 = vmatprep.subr.mxu0 0.0
    %565 = vmatpush2.msra.mxu0 0.0
    %566 = vmatprep.subr.mxu0 0.0
    %567 = vmatpush2.msra.mxu0 0.0
    %568 = vmatprep.subr.mxu0 0.0
    %569 = vmatpush2.msra.mxu0 0.0
    %570 = vmatprep.subr.mxu0 0.0
    %571 = vmatpush2.msra.mxu0 0.0
    %572 = vmatprep.subr.mxu0 0.0
    %573 = vmatpush2.msra.mxu0 0.0
    %574 = vmatprep.subr.mxu0 0.0
    %575 = vmatpush2.msra.mxu0 0.0
    %576 = vmatprep.subr.mxu0 0.0
    %577 = vmatpush2.msra.mxu0 0.0
    %578 = vmatprep.subr.mxu0 0.0
    %579 = vmatpush2.msra.mxu0 0.0
    %580 = vmatprep.mubr.f32.mxu0 0.0
    %581 = vmatmul.mubr.f32.gmra.mxu0 %v514
    %v582 = vpop.f32.mrf.mxu0
    %v583 = vadd.f32 0.0, %v582
    %v584 = vpop.f32.mrf.mxu0
    %585 = vdwg.mxu0
    %v586 = vadd.f32 %v102, %v583
    %v587 = vtanh.pop %v586
    %v588 = vmul.f32 %v587, %v56
    %v589 = vadd.f32 %v588, %v57
    %v591 = vrot.slane %v503, 6
    %v593 = vmul.f32 %v589, %v591
    %595 = vrot.lane.b32.xlu0 %v589, 64
    %v596 = vpop.permute.xlu0 %595
    %v598 = vmul.f32 %v589, %v596
    %600 = vrot.lane.b32.xlu0 %v598, 32
    %v601 = vpop.permute.xlu0 %600
    %v603 = vadd.f32 %v593, %v601
    %v604 = vtanh.pop %v603
    %606 = vrot.lane.b32.xlu0 %v604, 64
    %v607 = vpop.permute.xlu0 %606
    %v609 = vmul.f32 %v589, %v607
    %611 = vrot.lane.b32.xlu0 %v609, 32
    %v612 = vpop.permute.xlu0 %611
    %v613 = vsel %vm107, %v612, 0
    %615 = vmatprep.subr.mxu0 0.0
    %616 = vmatpush1.msra.mxu0 0.0
    %617 = vmatprep.subr.mxu0 0.0
    %618 = vmatpush1.msra.mxu0 0.0
    %619 = vmatprep.subr.mxu0 0.0
    %620 = vmatpush1.msra.mxu0 0.0
    %621 = vmatprep.subr.mxu0 0.0
    %622 = vmatpush1.msra.mxu0 0.0
    %623 = vmatprep.subr.mxu0 0.0
    %624 = vmatpush1.msra.mxu0 0.0
    %625 = vmatprep.subr.mxu0 0.0
    %626 = vmatpush1.msra.mxu0 0.0
    %627 = vmatprep.subr.mxu0 0.0
    %628 = vmatpush1.msra.mxu0 0.0
    %629 = vmatprep.subr.mxu0 0.0
    %630 = vmatpush1.msra.mxu0 0.0
    %631 = vmatprep.subr.mxu0 0.0
    %632 = vmatpush1.msra.mxu0 0.0
    %633 = vmatprep.subr.mxu0 0.0
    %634 = vmatpush1.msra.mxu0 0.0
    %635 = vmatprep.subr.mxu0 0.0
    %636 = vmatpush1.msra.mxu0 0.0
    %637 = vmatprep.subr.mxu0 0.0
    %638 = vmatpush1.msra.mxu0 0.0
    %639 = vmatprep.subr.mxu0 0.0
    %640 = vmatpush1.msra.mxu0 %v106
    %641 = vmatprep.subr.mxu0 0.0
    %642 = vmatpush1.msra.mxu0 %v105
    %643 = vmatprep.subr.mxu0 0.0
    %644 = vmatpush1.msra.mxu0 %v104
    %645 = vmatprep.subr.mxu0 0.0
    %646 = vmatpush1.msra.mxu0 %v103
    %647 = vmatprep.subr.mxu0 0.0
    %648 = vmatpush2.msra.mxu0 0.0
    %649 = vmatprep.subr.mxu0 0.0
    %650 = vmatpush2.msra.mxu0 0.0
    %651 = vmatprep.subr.mxu0 0.0
    %652 = vmatpush2.msra.mxu0 0.0
    %653 = vmatprep.subr.mxu0 0.0
    %654 = vmatpush2.msra.mxu0 0.0
    %655 = vmatprep.subr.mxu0 0.0
    %656 = vmatpush2.msra.mxu0 0.0
    %657 = vmatprep.subr.mxu0 0.0
    %658 = vmatpush2.msra.mxu0 0.0
    %659 = vmatprep.subr.mxu0 0.0
    %660 = vmatpush2.msra.mxu0 0.0
    %661 = vmatprep.subr.mxu0 0.0
    %662 = vmatpush2.msra.mxu0 0.0
    %663 = vmatprep.subr.mxu0 0.0
    %664 = vmatpush2.msra.mxu0 0.0
    %665 = vmatprep.subr.mxu0 0.0
    %666 = vmatpush2.msra.mxu0 0.0
    %667 = vmatprep.subr.mxu0 0.0
    %668 = vmatpush2.msra.mxu0 0.0
    %669 = vmatprep.subr.mxu0 0.0
    %670 = vmatpush2.msra.mxu0 0.0
    %671 = vmatprep.subr.mxu0 0.0
    %672 = vmatpush2.msra.mxu0 0.0
    %673 = vmatprep.subr.mxu0 0.0
    %674 = vmatpush2.msra.mxu0 0.0
    %675 = vmatprep.subr.mxu0 0.0
    %676 = vmatpush2.msra.mxu0 0.0
    %677 = vmatprep.subr.mxu0 0.0
    %678 = vmatpush2.msra.mxu0 0.0
    %679 = vmatprep.mubr.f32.mxu0 0.0
    %680 = vmatmul.mubr.f32.gmra.mxu0 %v613
    %v681 = vpop.f32.mrf.mxu0
    %v682 = vadd.f32 0.0, %v681
    %v683 = vpop.f32.mrf.mxu0
    %684 = vdwg.mxu0
    %v686 = vrot.slane %v682, 6
    %v688 = vadd.f32 %v102, %v686
    %v689 = vtanh.pop %v688
    %v690 = vmul.f32 %v689, %v56
    %v691 = vadd.f32 %v690, %v57
    %v693 = vrot.slane %v603, 6
    %v695 = vmul.f32 %v691, %v693
    %697 = vrot.lane.b32.xlu0 %v691, 64
    %v698 = vpop.permute.xlu0 %697
    %v700 = vmul.f32 %v691, %v698
    %702 = vrot.lane.b32.xlu0 %v700, 32
    %v703 = vpop.permute.xlu0 %702
    %v705 = vadd.f32 %v695, %v703
    %v706 = vtanh.pop %v705
    %708 = vrot.lane.b32.xlu0 %v706, 64
    %v709 = vpop.permute.xlu0 %708
    %v711 = vmul.f32 %v691, %v709
    %v713 = vrot.slane %v711, 2
    %714 = vrot.lane.b32.xlu0 %v713, 32
    %v715 = vpop.permute.xlu0 %714
    %v716 = vsel %vm107, %v715, 0
    %718 = vmatprep.subr.mxu0 0.0
    %719 = vmatpush1.msra.mxu0 0.0
    %720 = vmatprep.subr.mxu0 0.0
    %721 = vmatpush1.msra.mxu0 0.0
    %722 = vmatprep.subr.mxu0 0.0
    %723 = vmatpush1.msra.mxu0 0.0
    %724 = vmatprep.subr.mxu0 0.0
    %725 = vmatpush1.msra.mxu0 0.0
    %726 = vmatprep.subr.mxu0 0.0
    %727 = vmatpush1.msra.mxu0 0.0
    %728 = vmatprep.subr.mxu0 0.0
    %729 = vmatpush1.msra.mxu0 0.0
    %730 = vmatprep.subr.mxu0 0.0
    %731 = vmatpush1.msra.mxu0 0.0
    %732 = vmatprep.subr.mxu0 0.0
    %733 = vmatpush1.msra.mxu0 0.0
    %734 = vmatprep.subr.mxu0 0.0
    %735 = vmatpush1.msra.mxu0 0.0
    %736 = vmatprep.subr.mxu0 0.0
    %737 = vmatpush1.msra.mxu0 0.0
    %738 = vmatprep.subr.mxu0 0.0
    %739 = vmatpush1.msra.mxu0 0.0
    %740 = vmatprep.subr.mxu0 0.0
    %741 = vmatpush1.msra.mxu0 0.0
    %742 = vmatprep.subr.mxu0 0.0
    %743 = vmatpush1.msra.mxu0 %v106
    %744 = vmatprep.subr.mxu0 0.0
    %745 = vmatpush1.msra.mxu0 %v105
    %746 = vmatprep.subr.mxu0 0.0
    %747 = vmatpush1.msra.mxu0 %v104
    %748 = vmatprep.subr.mxu0 0.0
    %749 = vmatpush1.msra.mxu0 %v103
    %750 = vmatprep.subr.mxu0 0.0
    %751 = vmatpush2.msra.mxu0 0.0
    %752 = vmatprep.subr.mxu0 0.0
    %753 = vmatpush2.msra.mxu0 0.0
    %754 = vmatprep.subr.mxu0 0.0
    %755 = vmatpush2.msra.mxu0 0.0
    %756 = vmatprep.subr.mxu0 0.0
    %757 = vmatpush2.msra.mxu0 0.0
    %758 = vmatprep.subr.mxu0 0.0
    %759 = vmatpush2.msra.mxu0 0.0
    %760 = vmatprep.subr.mxu0 0.0
    %761 = vmatpush2.msra.mxu0 0.0
    %762 = vmatprep.subr.mxu0 0.0
    %763 = vmatpush2.msra.mxu0 0.0
    %764 = vmatprep.subr.mxu0 0.0
    %765 = vmatpush2.msra.mxu0 0.0
    %766 = vmatprep.subr.mxu0 0.0
    %767 = vmatpush2.msra.mxu0 0.0
    %768 = vmatprep.subr.mxu0 0.0
    %769 = vmatpush2.msra.mxu0 0.0
    %770 = vmatprep.subr.mxu0 0.0
    %771 = vmatpush2.msra.mxu0 0.0
    %772 = vmatprep.subr.mxu0 0.0
    %773 = vmatpush2.msra.mxu0 0.0
    %774 = vmatprep.subr.mxu0 0.0
    %775 = vmatpush2.msra.mxu0 0.0
    %776 = vmatprep.subr.mxu0 0.0
    %777 = vmatpush2.msra.mxu0 0.0
    %778 = vmatprep.subr.mxu0 0.0
    %779 = vmatpush2.msra.mxu0 0.0
    %780 = vmatprep.subr.mxu0 0.0
    %781 = vmatpush2.msra.mxu0 0.0
    %782 = vmatprep.mubr.f32.mxu0 0.0
    %783 = vmatmul.mubr.f32.gmra.mxu0 %v716
    %v784 = vpop.f32.mrf.mxu0
    %v785 = vadd.f32 0.0, %v784
    %v786 = vpop.f32.mrf.mxu0
    %787 = vdwg.mxu0
    %v789 = vrot.slane %v785, 4
    %v791 = vadd.f32 %v102, %v789
    %v792 = vtanh.pop %v791
    %v793 = vmul.f32 %v792, %v56
    %v794 = vadd.f32 %v793, %v57
    %v796 = vrot.slane %v705, 6
    %v798 = vmul.f32 %v794, %v796
    %800 = vrot.lane.b32.xlu0 %v794, 64
    %v801 = vpop.permute.xlu0 %800
    %v803 = vmul.f32 %v794, %v801
    %805 = vrot.lane.b32.xlu0 %v803, 32
    %v806 = vpop.permute.xlu0 %805
    %v808 = vadd.f32 %v798, %v806
    %v809 = vtanh.pop %v808
    %811 = vrot.lane.b32.xlu0 %v809, 64
    %v812 = vpop.permute.xlu0 %811
    %v814 = vmul.f32 %v794, %v812
    %v816 = vrot.slane %v814, 4
    %817 = vrot.lane.b32.xlu0 %v816, 32
    %v818 = vpop.permute.xlu0 %817
    %v819 = vsel %vm107, %v818, 0
    %821 = vmatprep.subr.mxu0 0.0
    %822 = vmatpush1.msra.mxu0 0.0
    %823 = vmatprep.subr.mxu0 0.0
    %824 = vmatpush1.msra.mxu0 0.0
    %825 = vmatprep.subr.mxu0 0.0
    %826 = vmatpush1.msra.mxu0 0.0
    %827 = vmatprep.subr.mxu0 0.0
    %828 = vmatpush1.msra.mxu0 0.0
    %829 = vmatprep.subr.mxu0 0.0
    %830 = vmatpush1.msra.mxu0 0.0
    %831 = vmatprep.subr.mxu0 0.0
    %832 = vmatpush1.msra.mxu0 0.0
    %833 = vmatprep.subr.mxu0 0.0
    %834 = vmatpush1.msra.mxu0 0.0
    %835 = vmatprep.subr.mxu0 0.0
    %836 = vmatpush1.msra.mxu0 0.0
    %837 = vmatprep.subr.mxu0 0.0
    %838 = vmatpush1.msra.mxu0 0.0
    %839 = vmatprep.subr.mxu0 0.0
    %840 = vmatpush1.msra.mxu0 0.0
    %841 = vmatprep.subr.mxu0 0.0
    %842 = vmatpush1.msra.mxu0 0.0
    %843 = vmatprep.subr.mxu0 0.0
    %844 = vmatpush1.msra.mxu0 0.0
    %845 = vmatprep.subr.mxu0 0.0
    %846 = vmatpush1.msra.mxu0 %v106
    %847 = vmatprep.subr.mxu0 0.0
    %848 = vmatpush1.msra.mxu0 %v105
    %849 = vmatprep.subr.mxu0 0.0
    %850 = vmatpush1.msra.mxu0 %v104
    %851 = vmatprep.subr.mxu0 0.0
    %852 = vmatpush1.msra.mxu0 %v103
    %853 = vmatprep.subr.mxu0 0.0
    %854 = vmatpush2.msra.mxu0 0.0
    %855 = vmatprep.subr.mxu0 0.0
    %856 = vmatpush2.msra.mxu0 0.0
    %857 = vmatprep.subr.mxu0 0.0
    %858 = vmatpush2.msra.mxu0 0.0
    %859 = vmatprep.subr.mxu0 0.0
    %860 = vmatpush2.msra.mxu0 0.0
    %861 = vmatprep.subr.mxu0 0.0
    %862 = vmatpush2.msra.mxu0 0.0
    %863 = vmatprep.subr.mxu0 0.0
    %864 = vmatpush2.msra.mxu0 0.0
    %865 = vmatprep.subr.mxu0 0.0
    %866 = vmatpush2.msra.mxu0 0.0
    %867 = vmatprep.subr.mxu0 0.0
    %868 = vmatpush2.msra.mxu0 0.0
    %869 = vmatprep.subr.mxu0 0.0
    %870 = vmatpush2.msra.mxu0 0.0
    %871 = vmatprep.subr.mxu0 0.0
    %872 = vmatpush2.msra.mxu0 0.0
    %873 = vmatprep.subr.mxu0 0.0
    %874 = vmatpush2.msra.mxu0 0.0
    %875 = vmatprep.subr.mxu0 0.0
    %876 = vmatpush2.msra.mxu0 0.0
    %877 = vmatprep.subr.mxu0 0.0
    %878 = vmatpush2.msra.mxu0 0.0
    %879 = vmatprep.subr.mxu0 0.0
    %880 = vmatpush2.msra.mxu0 0.0
    %881 = vmatprep.subr.mxu0 0.0
    %882 = vmatpush2.msra.mxu0 0.0
    %883 = vmatprep.subr.mxu0 0.0
    %884 = vmatpush2.msra.mxu0 0.0
    %885 = vmatprep.mubr.f32.mxu0 0.0
    %886 = vmatmul.mubr.f32.gmra.mxu0 %v819
    %v887 = vpop.f32.mrf.mxu0
    %v888 = vadd.f32 0.0, %v887
    %v889 = vpop.f32.mrf.mxu0
    %890 = vdwg.mxu0
    %v892 = vrot.slane %v888, 2
    %v894 = vadd.f32 %v102, %v892
    %v895 = vtanh.pop %v894
    %v896 = vmul.f32 %v895, %v56
    %v897 = vadd.f32 %v896, %v57
    %v899 = vrot.slane %v808, 6
    %v901 = vmul.f32 %v897, %v899
    %903 = vrot.lane.b32.xlu0 %v897, 64
    %v904 = vpop.permute.xlu0 %903
    %v906 = vmul.f32 %v897, %v904
    %908 = vrot.lane.b32.xlu0 %v906, 32
    %v909 = vpop.permute.xlu0 %908
    %v911 = vadd.f32 %v901, %v909
    %v912 = vld [vmem:[#allocation4] sm:$0xff]
    %v913 = vld [vmem:[#allocation4 + $0x8] sm:$0xff]
    %v914 = vld [vmem:[#allocation4 + $0x10] sm:$0xff]
    %v915 = vld [vmem:[#allocation4 + $0x18] sm:$0xff]
    %v916 = vld [vmem:[%s5] sm:$0x1]
    %v918 = vlaneseq
    %v919 = vshrl.u32 %v918, 7
    %v920 = vsub.s32 0, %v919
    %v921 = vrot.slane %v916, %v920
    %v924 = vrot.slane %v911, 6
    %925 = vrot.lane.b32.xlu0 %v924, 96
    %v926 = vpop.permute.xlu0 %925
    %v927 = vsel %vm107, %v926, 0
    %929 = vmatprep.subr.mxu0 0.0
    %930 = vmatpush1.msra.mxu0 0.0
    %931 = vmatprep.subr.mxu0 0.0
    %932 = vmatpush1.msra.mxu0 0.0
    %933 = vmatprep.subr.mxu0 0.0
    %934 = vmatpush1.msra.mxu0 0.0
    %935 = vmatprep.subr.mxu0 0.0
    %936 = vmatpush1.msra.mxu0 0.0
    %937 = vmatprep.subr.mxu0 0.0
    %938 = vmatpush1.msra.mxu0 0.0
    %939 = vmatprep.subr.mxu0 0.0
    %940 = vmatpush1.msra.mxu0 0.0
    %941 = vmatprep.subr.mxu0 0.0
    %942 = vmatpush1.msra.mxu0 0.0
    %943 = vmatprep.subr.mxu0 0.0
    %944 = vmatpush1.msra.mxu0 0.0
    %945 = vmatprep.subr.mxu0 0.0
    %946 = vmatpush1.msra.mxu0 0.0
    %947 = vmatprep.subr.mxu0 0.0
    %948 = vmatpush1.msra.mxu0 0.0
    %949 = vmatprep.subr.mxu0 0.0
    %950 = vmatpush1.msra.mxu0 0.0
    %951 = vmatprep.subr.mxu0 0.0
    %952 = vmatpush1.msra.mxu0 0.0
    %953 = vmatprep.subr.mxu0 0.0
    %954 = vmatpush1.msra.mxu0 %v915
    %955 = vmatprep.subr.mxu0 0.0
    %956 = vmatpush1.msra.mxu0 %v914
    %957 = vmatprep.subr.mxu0 0.0
    %958 = vmatpush1.msra.mxu0 %v913
    %959 = vmatprep.subr.mxu0 0.0
    %960 = vmatpush1.msra.mxu0 %v912
    %961 = vmatprep.subr.mxu0 0.0
    %962 = vmatpush2.msra.mxu0 0.0
    %963 = vmatprep.subr.mxu0 0.0
    %964 = vmatpush2.msra.mxu0 0.0
    %965 = vmatprep.subr.mxu0 0.0
    %966 = vmatpush2.msra.mxu0 0.0
    %967 = vmatprep.subr.mxu0 0.0
    %968 = vmatpush2.msra.mxu0 0.0
    %969 = vmatprep.subr.mxu0 0.0
    %970 = vmatpush2.msra.mxu0 0.0
    %971 = vmatprep.subr.mxu0 0.0
    %972 = vmatpush2.msra.mxu0 0.0
    %973 = vmatprep.subr.mxu0 0.0
    %974 = vmatpush2.msra.mxu0 0.0
    %975 = vmatprep.subr.mxu0 0.0
    %976 = vmatpush2.msra.mxu0 0.0
    %977 = vmatprep.subr.mxu0 0.0
    %978 = vmatpush2.msra.mxu0 0.0
    %979 = vmatprep.subr.mxu0 0.0
    %980 = vmatpush2.msra.mxu0 0.0
    %981 = vmatprep.subr.mxu0 0.0
    %982 = vmatpush2.msra.mxu0 0.0
    %983 = vmatprep.subr.mxu0 0.0
    %984 = vmatpush2.msra.mxu0 0.0
    %985 = vmatprep.subr.mxu0 0.0
    %986 = vmatpush2.msra.mxu0 0.0
    %987 = vmatprep.subr.mxu0 0.0
    %988 = vmatpush2.msra.mxu0 0.0
    %989 = vmatprep.subr.mxu0 0.0
    %990 = vmatpush2.msra.mxu0 0.0
    %991 = vmatprep.subr.mxu0 0.0
    %992 = vmatpush2.msra.mxu0 0.0
    %993 = vmatprep.mubr.f32.mxu0 0.0
    %994 = vmatmul.mubr.f32.gmra.mxu0 %v927
    %v995 = vpop.f32.mrf.mxu0
    %v996 = vadd.f32 %v921, %v995
    %v997 = vpop.f32.mrf.mxu0
    %998 = vdwg.mxu0
    %vm999 = vcmask 254976
    %1000 = vst.msk [vmem:[%s6] sm:$0x3] %vm999, %v996
    // Predicated region
    $region34: #{encoder_forward.1} parent=1 // pred_check
      _
    $region35: #{encoder_forward.1} parent=1 // pred_check_branch
      %1002 = sbr.rel (0) target = $region37
    $region36: #{encoder_forward.1} parent=1 // pred_region
      _
    $region37: #{encoder_forward.1} parent=1 // pred_fallthru
      _
    // Predicated region
    $region38: #{encoder_forward.1} parent=1 // pred_check
      _
    $region39: #{encoder_forward.1} parent=1 // pred_check_branch
      %1004 = sbr.rel (0) target = $region41
    $region40: #{encoder_forward.1} parent=1 // pred_region
      _
    $region41: #{encoder_forward.1} parent=1 // pred_fallthru
      _
    %1005 = vsyncpa [#allocation3], 1
    %1006 = vsyncpa [#allocation5], 1

</llo_original>
